<compile_context>
chip_gen: v7x
topology: tpu7x:2x2x1
jax: 0.10.0
libtpu: 0.0.40
codegen_flags: <defaults>
</compile_context>

<pallas_src>
import jax
import jax.numpy as jnp
from jax.experimental import pallas as pl
from jax.experimental.pallas import tpu as pltpu

_LANE = 128  # lane width: last-dim alignment for dense stores / full MXU tiles


def _cdiv(a, b):
    return -(-a // b)


def _round_up(x, m):
    return _cdiv(x, m) * m


def _vmem_cap_bytes():
    """Per-generation VMEM budget: physical VMEM minus compiler headroom."""
    phys = 64 << 20  # conservative fallback = v7x per-TC VMEM
    try:
        info = pltpu.get_tpu_info()
        for name in ("vmem_capacity_bytes", "vmem_bytes", "vmem_size_bytes"):
            v = getattr(info, name, None)
            if v:
                phys = int(v)
                break
    except Exception:
        pass
    # ~16 MiB headroom for f32 temporaries / casts / internal scratch.
    return max(phys - (16 << 20), 32 << 20)


def mlp_kernel(x_ref, w1_ref, b1_ref, w2_ref, b2_ref, o_ref):
    # One batch tile per grid step: two fused MXU matmuls + VPU bias/ReLU.
    # Accumulation is f32; bias add and ReLU are f32.
    h = jnp.dot(x_ref[...], w1_ref[...], preferred_element_type=jnp.float32)
    h = jnp.maximum(h + b1_ref[...], 0.0)
    # For bf16 MXU mode this downcasts the f32 ReLU output to bf16 before the
    # second matmul (standard inference fusion); accumulation stays f32.
    y = jnp.dot(h.astype(w2_ref.dtype), w2_ref[...],
                preferred_element_type=jnp.float32)
    o_ref[...] = (y + b2_ref[...]).astype(o_ref.dtype)


def make_mlp(w1_t, b1, w2_t, b2, *, tile_b_max=512, mxu_dtype=None):
    """Builds a jitted forward.

    w1_t: (D_in, H)  (nn.Linear weight pre-transposed), b1: (H,)
    w2_t: (H, D_out),                                   b2: (D_out,)
    mxu_dtype: optional dtype for the MXU operands (e.g. jnp.bfloat16).
    """
    D_in, H = w1_t.shape
    H2, D_out = w2_t.shape
    if H2 != H:
        raise ValueError("w2_t first dim must equal hidden size")

    w_dtype = jnp.dtype(mxu_dtype) if mxu_dtype is not None else jnp.dtype(w1_t.dtype)

    D_in_p = _round_up(D_in, _LANE)
    H_p = _round_up(H, _LANE)
    D_out_p = _round_up(D_out, _LANE)

    # --- pad weights/biases ONCE (not per forward call) ----------------------
    w1_p = jnp.zeros((D_in_p, H_p), w_dtype).at[:D_in, :H].set(w1_t.astype(w_dtype))
    w2_p = jnp.zeros((H_p, D_out_p), w_dtype).at[:H, :D_out].set(w2_t.astype(w_dtype))
    b1_p = jnp.zeros((1, H_p), jnp.float32).at[0, :H].set(b1.astype(jnp.float32))
    b2_p = jnp.zeros((1, D_out_p), jnp.float32).at[0, :D_out].set(b2.astype(jnp.float32))

    w_isz = jnp.dtype(w_dtype).itemsize
    vmem_cap = _vmem_cap_bytes()

    def _footprint(tile_b, x_isz, out_isz):
        return (
            (w1_p.size + w2_p.size) * w_isz            # resident weights (single-buffered)
            + (b1_p.size + b2_p.size) * 4               # resident biases
            + 2 * tile_b * D_in_p * x_isz               # x tile, double-buffered
            + 2 * tile_b * D_out_p * out_isz            # out tile, double-buffered
            + tile_b * H_p * 4                          # f32 intermediate h
            + tile_b * D_out_p * 4                      # f32 accumulator y
        )

    # TODO(synk): for very large H the weights and the (tile_b, H_p) intermediate
    # should be chunked over an extra "arbitrary" H grid axis with a VMEM f32
    # accumulator; not needed at the shapes this module is used with.

    @jax.jit
    def _fwd2d(x2d, w1_p, b1_p, w2_p, b2_p):
        B, d_in = x2d.shape
        if d_in != D_in:
            raise ValueError(f"expected last dim {D_in}, got {d_in}")
        out_dtype = x2d.dtype
        x_dtype = w_dtype                                # feed MXU in the weight dtype
        x_isz = jnp.dtype(x_dtype).itemsize
        out_isz = jnp.dtype(out_dtype).itemsize
        # sublane alignment for the batch tile (16 for 2-byte dtypes, else 8)
        sub = 16 if min(x_isz, out_isz) == 2 or max(x_isz, out_isz) == 2 else 8
        sub = 16 if (x_isz == 2 or out_isz == 2) else 8

        # --- even-coverage batch tiling; >=4 tiles when batch allows ---------
        B_a = _round_up(B, sub)
        n_tiles = max(_cdiv(B_a, tile_b_max), min(4, B_a // sub))
        tile_b = _round_up(_cdiv(B_a, n_tiles), sub)
        # shrink tile_b if the footprint would blow the per-generation VMEM cap
        while tile_b > sub and _footprint(tile_b, x_isz, out_isz) > vmem_cap:
            tile_b = _round_up(tile_b // 2, sub)
        grid_b = _cdiv(B_a, tile_b)
        B_p = grid_b * tile_b

        xc = x2d.astype(x_dtype)
        if (B_p, D_in_p) != xc.shape:
            x_p = jnp.zeros((B_p, D_in_p), x_dtype).at[:B, :D_in].set(xc)
        else:
            x_p = xc

        vmem_limit = int(min(max(int(1.5 * _footprint(tile_b, x_isz, out_isz)),
                                 16 << 20), vmem_cap))

        # advisory estimate using unpadded (logical) traffic
        cost = pl.CostEstimate(
            flops=2 * B * D_in * H + 2 * B * H * D_out,
            transcendentals=0,
            bytes_accessed=(B * D_in * x_isz + B * D_out * out_isz
                            + (D_in * H + H * D_out) * w_isz
                            + (H + D_out) * 4),
        )

        resident = dict(pipeline_mode=pl.Buffered(1))   # invariant operands: 1 buffer

        out_p = pl.pallas_call(
            mlp_kernel,
            out_shape=jax.ShapeDtypeStruct((B_p, D_out_p), out_dtype),
            grid_spec=pltpu.PrefetchScalarGridSpec(
                num_scalar_prefetch=0,
                grid=(grid_b,),
                in_specs=[
                    pl.BlockSpec((tile_b, D_in_p), lambda i: (i, 0)),           # streamed
                    pl.BlockSpec((D_in_p, H_p), lambda i: (0, 0), **resident),  # resident
                    pl.BlockSpec((1, H_p), lambda i: (0, 0), **resident),       # resident
                    pl.BlockSpec((H_p, D_out_p), lambda i: (0, 0), **resident), # resident
                    pl.BlockSpec((1, D_out_p), lambda i: (0, 0), **resident),   # resident
                ],
                out_specs=pl.BlockSpec((tile_b, D_out_p), lambda i: (i, 0)),
            ),
            compiler_params=pltpu.CompilerParams(
                dimension_semantics=("parallel",),   # batch tiles shard across TCs (v7x)
                vmem_limit_bytes=vmem_limit,
            ),
            cost_estimate=cost,
        )(x_p, w1_p, b1_p, w2_p, b2_p)

        # TODO(synk): for D_out << 128 a lane-folded output layout (several batch
        # rows per 128-lane row) would avoid the 128-wide write amplification.
        return out_p[:B, :D_out]

    def forward(x):
        if x.ndim == 2:
            return _fwd2d(x, w1_p, b1_p, w2_p, b2_p)
        lead = x.shape[:-1]
        y = _fwd2d(x.reshape(-1, x.shape[-1]), w1_p, b1_p, w2_p, b2_p)
        return y.reshape(lead + (D_out,))

    return forward


def init_mlp_params(key, input_size, hidden_size1, output_size, dtype=jnp.float32):
    """Deterministic init mimicking nn.Linear's uniform(-1/sqrt(fan_in), +)."""
    k1, k2, k3, k4 = jax.random.split(key, 4)
    lim1 = 1.0 / (input_size ** 0.5)
    lim2 = 1.0 / (hidden_size1 ** 0.5)
    # stored already transposed: (in, out)
    w1_t = jax.random.uniform(k1, (input_size, hidden_size1), dtype, -lim1, lim1)
    b1 = jax.random.uniform(k2, (hidden_size1,), dtype, -lim1, lim1)
    w2_t = jax.random.uniform(k3, (hidden_size1, output_size), dtype, -lim2, lim2)
    b2 = jax.random.uniform(k4, (output_size,), dtype, -lim2, lim2)
    return w1_t, b1, w2_t, b2


if __name__ == "__main__":
    key = jax.random.PRNGKey(0)
    kx, kp, kx2 = jax.random.split(key, 3)

    input_size, hidden_size1, output_size = 16, 32, 8
    w1_t, b1, w2_t, b2 = init_mlp_params(kp, input_size, hidden_size1, output_size)

    def reference(x):
        hp = jnp.dot(x, w1_t, precision=jax.lax.Precision.HIGHEST) + b1
        hp = jnp.maximum(hp, 0.0)
        return jnp.dot(hp, w2_t, precision=jax.lax.Precision.HIGHEST) + b2

    # --- f32 path, single tile -------------------------------------------------
    x = jax.random.normal(kx, (8, input_size), jnp.float32)
    mlp_f32 = make_mlp(w1_t, b1, w2_t, b2)
    out = jax.block_until_ready(mlp_f32(x))
    ref = reference(x)
    assert out.shape == (8, output_size)
    assert jnp.allclose(out, ref, atol=1e-3, rtol=1e-3)

    # --- f32 path, multi-tile batch (grid_b > 1, even-coverage tiling) ---------
    xb = jax.random.normal(kx2, (300, input_size), jnp.float32)
    outb = jax.block_until_ready(mlp_f32(xb))
    refb = reference(xb)
    assert outb.shape == (300, output_size)
    assert jnp.allclose(outb, refb, atol=1e-3, rtol=1e-3)

    # --- bf16 MXU path (f32 accumulation; standard bf16 inference tolerance) ---
    mlp_bf16 = make_mlp(w1_t, b1, w2_t, b2, mxu_dtype=jnp.bfloat16)
    outh = jax.block_until_ready(mlp_bf16(x))
    assert outh.shape == (8, output_size)
    assert jnp.allclose(outh, ref, atol=5e-2, rtol=5e-2)

    print("KERNEL_OK")
</pallas_src>

<mosaic_0001>
module attributes {stable_mosaic.version = 11 : i64} {
  func.func @mlp_kernel(%arg0: i32, %arg1: memref<8x128xf32, #tpu.memory_space<vmem>>, %arg2: memref<128x128xf32, #tpu.memory_space<vmem>>, %arg3: memref<1x128xf32, #tpu.memory_space<vmem>>, %arg4: memref<128x128xf32, #tpu.memory_space<vmem>>, %arg5: memref<1x128xf32, #tpu.memory_space<vmem>>, %arg6: memref<8x128xf32, #tpu.memory_space<vmem>>) attributes {dimension_semantics = [#tpu.dimension_semantics<parallel>], iteration_bounds = array<i64: 1>, scalar_prefetch = 0 : i64, scratch_operands = 0 : i64, tpu.core_type = #tpu.core_type<tc>, window_params = [{transform_indices = @transform_0, window_bounds = array<i64: 8, 128>}, {pipeline_mode = #tpu.pipeline_mode<synchronous>, transform_indices = @transform_1, window_bounds = array<i64: 128, 128>}, {pipeline_mode = #tpu.pipeline_mode<synchronous>, transform_indices = @transform_2, window_bounds = array<i64: 1, 128>}, {pipeline_mode = #tpu.pipeline_mode<synchronous>, transform_indices = @transform_3, window_bounds = array<i64: 128, 128>}, {pipeline_mode = #tpu.pipeline_mode<synchronous>, transform_indices = @transform_4, window_bounds = array<i64: 1, 128>}, {transform_indices = @transform_5, window_bounds = array<i64: 8, 128>}]} {
    %c0 = arith.constant 0 : index
    %c0_0 = arith.constant 0 : index
    %0 = vector.load %arg1[%c0, %c0_0] : memref<8x128xf32, #tpu.memory_space<vmem>>, vector<8x128xf32>
    %c0_1 = arith.constant 0 : index
    %c0_2 = arith.constant 0 : index
    %1 = vector.load %arg2[%c0_1, %c0_2] : memref<128x128xf32, #tpu.memory_space<vmem>>, vector<128x128xf32>
    %cst = arith.constant dense<0.000000e+00> : vector<8x128xf32>
    %2 = tpu.matmul %0, %1, %cst {dimension_numbers = #tpu.dot_dimension_numbers<[1], [0], [0], [1], [0, 0, 1, 1], [], []>} : vector<8x128xf32>, vector<128x128xf32>, vector<8x128xf32> -> vector<8x128xf32>
    %c0_3 = arith.constant 0 : index
    %c0_4 = arith.constant 0 : index
    %3 = vector.load %arg3[%c0_3, %c0_4] : memref<1x128xf32, #tpu.memory_space<vmem>>, vector<1x128xf32>
    %4 = vector.broadcast %3 : vector<1x128xf32> to vector<8x128xf32>
    %5 = arith.addf %2, %4 : vector<8x128xf32>
    %cst_5 = arith.constant 0.000000e+00 : f32
    %6 = vector.broadcast %cst_5 : f32 to vector<8x128xf32>
    %7 = arith.maximumf %5, %6 : vector<8x128xf32>
    %c0_6 = arith.constant 0 : index
    %c0_7 = arith.constant 0 : index
    %8 = vector.load %arg4[%c0_6, %c0_7] : memref<128x128xf32, #tpu.memory_space<vmem>>, vector<128x128xf32>
    %cst_8 = arith.constant dense<0.000000e+00> : vector<8x128xf32>
    %9 = tpu.matmul %7, %8, %cst_8 {dimension_numbers = #tpu.dot_dimension_numbers<[1], [0], [0], [1], [0, 0, 1, 1], [], []>} : vector<8x128xf32>, vector<128x128xf32>, vector<8x128xf32> -> vector<8x128xf32>
    %c0_9 = arith.constant 0 : index
    %c0_10 = arith.constant 0 : index
    %10 = vector.load %arg5[%c0_9, %c0_10] : memref<1x128xf32, #tpu.memory_space<vmem>>, vector<1x128xf32>
    %11 = vector.broadcast %10 : vector<1x128xf32> to vector<8x128xf32>
    %12 = arith.addf %9, %11 : vector<8x128xf32>
    %c0_11 = arith.constant 0 : index
    %c0_12 = arith.constant 0 : index
    %13 = vector.load %arg6[%c0_11, %c0_12] : memref<8x128xf32, #tpu.memory_space<vmem>>, vector<8x128xf32>
    tpu.vector_store %arg6[%c0_11, %c0_12], %12 {strides = array<i32>} : memref<8x128xf32, #tpu.memory_space<vmem>>, vector<8x128xf32>,
    return
  }
  func.func @transform_0(%arg0: i32) -> (i32, i32) {
    %c0_i32 = arith.constant 0 : i32
    %c0_i32_0 = arith.constant 0 : i32
    return %arg0, %c0_i32 : i32, i32
  }
  func.func @transform_1(%arg0: i32) -> (i32, i32) {
    %c0_i32 = arith.constant 0 : i32
    %c0_i32_0 = arith.constant 0 : i32
    %c0_i32_1 = arith.constant 0 : i32
    return %c0_i32, %c0_i32_0 : i32, i32
  }
  func.func @transform_2(%arg0: i32) -> (i32, i32) {
    %c0_i32 = arith.constant 0 : i32
    %c0_i32_0 = arith.constant 0 : i32
    %c0_i32_1 = arith.constant 0 : i32
    return %c0_i32, %c0_i32_0 : i32, i32
  }
  func.func @transform_3(%arg0: i32) -> (i32, i32) {
    %c0_i32 = arith.constant 0 : i32
    %c0_i32_0 = arith.constant 0 : i32
    %c0_i32_1 = arith.constant 0 : i32
    return %c0_i32, %c0_i32_0 : i32, i32
  }
  func.func @transform_4(%arg0: i32) -> (i32, i32) {
    %c0_i32 = arith.constant 0 : i32
    %c0_i32_0 = arith.constant 0 : i32
    %c0_i32_1 = arith.constant 0 : i32
    return %c0_i32, %c0_i32_0 : i32, i32
  }
  func.func @transform_5(%arg0: i32) -> (i32, i32) {
    %c0_i32 = arith.constant 0 : i32
    %c0_i32_0 = arith.constant 0 : i32
    return %arg0, %c0_i32 : i32, i32
  }
}

</mosaic_0001>

<llo_original>
// kernel: _fwd2d.1
$region0: #{_fwd2d.1}
  #allocation0 [shape = 'u32[]', space=smem, size = 0x4, offset = 0x4, fixed_abs, tag = 'smem constant byte address 0x4 - core index']
  #allocation1 [shape = 'u32[144,128]{1,0:T(1,128)}', space=vmem, size = 0x12000, scoped, tag = 'internal scratch']
  %s0 = inlined_call_operand.vmem [shape: f32[8,128], index: 0, kind: input, shape index: {}]
  %s1 = inlined_call_operand.hbm [shape: f32[128,128], index: 1, kind: input, shape index: {}]
  %s2 = inlined_call_operand.vmem [shape: f32[1,128], index: 2, kind: input, shape index: {}]
  %s3 = inlined_call_operand.hbm [shape: f32[128,128], index: 3, kind: input, shape index: {}]
  %s4 = inlined_call_operand.vmem [shape: f32[1,128], index: 4, kind: input, shape index: {}]
  %s5 = inlined_call_operand.hbm [shape: f32[8,128], index: 5, kind: output, shape index: {}]
  %s6 = sld [smem:[#allocation0]]
  $region38: #{_fwd2d.1} parent=0
    _
  %s8 = ssub.s32 1, %s6
  %s9 = scalar_select 0, %s8, %s6
  $region1: #{_fwd2d.1} parent=0
    #allocation2 [shape = 'u8[65536]{0}', space=vmem, size = 0x10000, scoped, tag = 'input window, operand 1, single buffered']
    #allocation3 [shape = 's32[1]{0}', space=sflag, size = 0x4, scoped, tag = 'scoped memory for _fwd2d.1']
    #allocation4 [shape = 's32[1]{0}', space=sflag, size = 0x4, scoped, tag = 'scoped memory for _fwd2d.1']
    #allocation5 [shape = 'u8[65536]{0}', space=vmem, size = 0x10000, scoped, tag = 'input window, operand 3, single buffered']
    #allocation6 [shape = 's32[1]{0}', space=sflag, size = 0x4, scoped, tag = 'scoped memory for _fwd2d.1']
    #allocation7 [shape = 'u8[4096]{0}', space=vmem, size = 0x1000, scoped, tag = 'output window, operand 0, single buffered']
    %10 = vsyncpa [#allocation3], 0
    %11 = vsyncpa [#allocation6], 0
    %12 = vsyncpa [#allocation4], 0
    // Predicated region
    $region2: #{_fwd2d.1} parent=1 // pred_check
      _
    $region3: #{_fwd2d.1} parent=1 // pred_check_branch
      %14 = sbr.rel (0) target = $region5
    $region4: #{_fwd2d.1} parent=1 // pred_region
      _
    $region5: #{_fwd2d.1} parent=1 // pred_fallthru
      _
    // Predicated region
    $region6: #{_fwd2d.1} parent=1 // pred_check
      _
    $region7: #{_fwd2d.1} parent=1 // pred_check_branch
      %16 = sbr.rel (0) target = $region9
    $region8: #{_fwd2d.1} parent=1 // pred_region
      %s18 = ssub.s32 2048, 2048
      %19 = vsyncadd [#allocation3], %s18
      %s20 = sshll.u32 [#allocation2], 4
      %s21 = int_to_ptr.vmem [resolvable:$true] %s20
      %26 = dma.hbm_to_vmem [thread:$0]  %s1, 2048, %s21, [#allocation3], 128, 128, 8
    $region9: #{_fwd2d.1} parent=1 // pred_fallthru
      _
    // Predicated region
    $region10: #{_fwd2d.1} parent=1 // pred_check
      _
    $region11: #{_fwd2d.1} parent=1 // pred_check_branch
      %28 = sbr.rel (0) target = $region13
    $region12: #{_fwd2d.1} parent=1 // pred_region
      _
    $region13: #{_fwd2d.1} parent=1 // pred_fallthru
      _
    // Predicated region
    $region14: #{_fwd2d.1} parent=1 // pred_check
      _
    $region15: #{_fwd2d.1} parent=1 // pred_check_branch
      %30 = sbr.rel (0) target = $region17
    $region16: #{_fwd2d.1} parent=1 // pred_region
      %s32 = ssub.s32 2048, 2048
      %33 = vsyncadd [#allocation6], %s32
      %s34 = sshll.u32 [#allocation5], 4
      %s35 = int_to_ptr.vmem [resolvable:$true] %s34
      %40 = dma.hbm_to_vmem [thread:$0]  %s3, 2048, %s35, [#allocation6], 128, 128, 8
    $region17: #{_fwd2d.1} parent=1 // pred_fallthru
      _
    // Predicated region
    $region18: #{_fwd2d.1} parent=1 // pred_check
      _
    $region19: #{_fwd2d.1} parent=1 // pred_check_branch
      %42 = sbr.rel (0) target = $region21
    $region20: #{_fwd2d.1} parent=1 // pred_region
      _
    $region21: #{_fwd2d.1} parent=1 // pred_fallthru
      _
    // Predicated region
    $region22: #{_fwd2d.1} parent=1 // pred_check
      _
    $region23: #{_fwd2d.1} parent=1 // pred_check_branch
      %44 = sbr.rel (0) target = $region25
    $region24: #{_fwd2d.1} parent=1 // pred_region
      %45 = dma.done [#allocation3], 2048
    $region25: #{_fwd2d.1} parent=1 // pred_fallthru
      _
    // Predicated region
    $region26: #{_fwd2d.1} parent=1 // pred_check
      _
    $region27: #{_fwd2d.1} parent=1 // pred_check_branch
      %47 = sbr.rel (0) target = $region29
    $region28: #{_fwd2d.1} parent=1 // pred_region
      %48 = dma.done [#allocation6], 2048
    $region29: #{_fwd2d.1} parent=1 // pred_fallthru
      _
    %v49 = vld [vmem:[%s0] sm:$0xff]
    %v50 = vld [vmem:[#allocation2] sm:$0xff]
    %v51 = vld [vmem:[#allocation2 + $0x8] sm:$0xff]
    %v52 = vld [vmem:[#allocation2 + $0x10] sm:$0xff]
    %v53 = vld [vmem:[#allocation2 + $0x18] sm:$0xff]
    %v54 = vld [vmem:[#allocation2 + $0x20] sm:$0xff]
    %v55 = vld [vmem:[#allocation2 + $0x28] sm:$0xff]
    %v56 = vld [vmem:[#allocation2 + $0x30] sm:$0xff]
    %v57 = vld [vmem:[#allocation2 + $0x38] sm:$0xff]
    %v58 = vld [vmem:[#allocation2 + $0x40] sm:$0xff]
    %v59 = vld [vmem:[#allocation2 + $0x48] sm:$0xff]
    %v60 = vld [vmem:[#allocation2 + $0x50] sm:$0xff]
    %v61 = vld [vmem:[#allocation2 + $0x58] sm:$0xff]
    %v62 = vld [vmem:[#allocation2 + $0x60] sm:$0xff]
    %v63 = vld [vmem:[#allocation2 + $0x68] sm:$0xff]
    %v64 = vld [vmem:[#allocation2 + $0x70] sm:$0xff]
    %v65 = vld [vmem:[#allocation2 + $0x78] sm:$0xff]
    %v66 = vld [vmem:[%s2] sm:$0x1]
    %v68 = vlaneseq
    %v69 = vshrl.u32 %v68, 7
    %v70 = vsub.s32 0, %v69
    %v71 = vrot.slane %v66, %v70
    %73 = vmatprep.subr.mxu0 0.0
    %74 = vmatpush1.msra.mxu0 %v50
    %75 = vmatprep.subr.mxu0 0.0
    %76 = vmatpush1.msra.mxu0 %v51
    %77 = vmatprep.subr.mxu0 0.0
    %78 = vmatpush1.msra.mxu0 %v52
    %79 = vmatprep.subr.mxu0 0.0
    %80 = vmatpush1.msra.mxu0 %v53
    %81 = vmatprep.subr.mxu0 0.0
    %82 = vmatpush1.msra.mxu0 %v54
    %83 = vmatprep.subr.mxu0 0.0
    %84 = vmatpush1.msra.mxu0 %v55
    %85 = vmatprep.subr.mxu0 0.0
    %86 = vmatpush1.msra.mxu0 %v56
    %87 = vmatprep.subr.mxu0 0.0
    %88 = vmatpush1.msra.mxu0 %v57
    %89 = vmatprep.subr.mxu0 0.0
    %90 = vmatpush1.msra.mxu0 %v58
    %91 = vmatprep.subr.mxu0 0.0
    %92 = vmatpush1.msra.mxu0 %v59
    %93 = vmatprep.subr.mxu0 0.0
    %94 = vmatpush1.msra.mxu0 %v60
    %95 = vmatprep.subr.mxu0 0.0
    %96 = vmatpush1.msra.mxu0 %v61
    %97 = vmatprep.subr.mxu0 0.0
    %98 = vmatpush1.msra.mxu0 %v62
    %99 = vmatprep.subr.mxu0 0.0
    %100 = vmatpush1.msra.mxu0 %v63
    %101 = vmatprep.subr.mxu0 0.0
    %102 = vmatpush1.msra.mxu0 %v64
    %103 = vmatprep.subr.mxu0 0.0
    %104 = vmatpush1.msra.mxu0 %v65
    %105 = vmatprep.subr.mxu0 0.0
    %106 = vmatpush1.msra.mxu0 0.0
    %107 = vmatprep.subr.mxu0 0.0
    %108 = vmatpush1.msra.mxu0 0.0
    %109 = vmatprep.subr.mxu0 0.0
    %110 = vmatpush1.msra.mxu0 0.0
    %111 = vmatprep.subr.mxu0 0.0
    %112 = vmatpush1.msra.mxu0 0.0
    %113 = vmatprep.subr.mxu0 0.0
    %114 = vmatpush1.msra.mxu0 0.0
    %115 = vmatprep.subr.mxu0 0.0
    %116 = vmatpush1.msra.mxu0 0.0
    %117 = vmatprep.subr.mxu0 0.0
    %118 = vmatpush1.msra.mxu0 0.0
    %119 = vmatprep.subr.mxu0 0.0
    %120 = vmatpush1.msra.mxu0 0.0
    %121 = vmatprep.subr.mxu0 0.0
    %122 = vmatpush1.msra.mxu0 0.0
    %123 = vmatprep.subr.mxu0 0.0
    %124 = vmatpush1.msra.mxu0 0.0
    %125 = vmatprep.subr.mxu0 0.0
    %126 = vmatpush1.msra.mxu0 0.0
    %127 = vmatprep.subr.mxu0 0.0
    %128 = vmatpush1.msra.mxu0 0.0
    %129 = vmatprep.subr.mxu0 0.0
    %130 = vmatpush1.msra.mxu0 0.0
    %131 = vmatprep.subr.mxu0 0.0
    %132 = vmatpush1.msra.mxu0 0.0
    %133 = vmatprep.subr.mxu0 0.0
    %134 = vmatpush1.msra.mxu0 0.0
    %135 = vmatprep.subr.mxu0 0.0
    %136 = vmatpush1.msra.mxu0 0.0
    %137 = vmatprep.mubr.f32.mxu0 0.0
    %138 = vmatmul.mubr.f32.gmra.mrb[0].mxu0 %v49
    %v139 = vpop.f32.mrb[0].mxu0
    %v140 = vadd.f32 %v71, %v139
    %v141 = vpop.f32.mrb[0].mxu0
    %142 = vdwg.mxu0
    %v143 = vmax.f32 %v140, 0.0
    %v144 = vld [vmem:[#allocation5] sm:$0xff]
    %v145 = vld [vmem:[#allocation5 + $0x8] sm:$0xff]
    %v146 = vld [vmem:[#allocation5 + $0x10] sm:$0xff]
    %v147 = vld [vmem:[#allocation5 + $0x18] sm:$0xff]
    %v148 = vld [vmem:[#allocation5 + $0x20] sm:$0xff]
    %v149 = vld [vmem:[#allocation5 + $0x28] sm:$0xff]
    %v150 = vld [vmem:[#allocation5 + $0x30] sm:$0xff]
    %v151 = vld [vmem:[#allocation5 + $0x38] sm:$0xff]
    %v152 = vld [vmem:[#allocation5 + $0x40] sm:$0xff]
    %v153 = vld [vmem:[#allocation5 + $0x48] sm:$0xff]
    %v154 = vld [vmem:[#allocation5 + $0x50] sm:$0xff]
    %v155 = vld [vmem:[#allocation5 + $0x58] sm:$0xff]
    %v156 = vld [vmem:[#allocation5 + $0x60] sm:$0xff]
    %v157 = vld [vmem:[#allocation5 + $0x68] sm:$0xff]
    %v158 = vld [vmem:[#allocation5 + $0x70] sm:$0xff]
    %v159 = vld [vmem:[#allocation5 + $0x78] sm:$0xff]
    %v160 = vld [vmem:[%s4] sm:$0x1]
    %v162 = vlaneseq
    %v163 = vshrl.u32 %v162, 7
    %v164 = vsub.s32 0, %v163
    %v165 = vrot.slane %v160, %v164
    %167 = vmatprep.subr.mxu0 0.0
    %168 = vmatpush1.msra.mxu0 %v144
    %169 = vmatprep.subr.mxu0 0.0
    %170 = vmatpush1.msra.mxu0 %v145
    %171 = vmatprep.subr.mxu0 0.0
    %172 = vmatpush1.msra.mxu0 %v146
    %173 = vmatprep.subr.mxu0 0.0
    %174 = vmatpush1.msra.mxu0 %v147
    %175 = vmatprep.subr.mxu0 0.0
    %176 = vmatpush1.msra.mxu0 %v148
    %177 = vmatprep.subr.mxu0 0.0
    %178 = vmatpush1.msra.mxu0 %v149
    %179 = vmatprep.subr.mxu0 0.0
    %180 = vmatpush1.msra.mxu0 %v150
    %181 = vmatprep.subr.mxu0 0.0
    %182 = vmatpush1.msra.mxu0 %v151
    %183 = vmatprep.subr.mxu0 0.0
    %184 = vmatpush1.msra.mxu0 %v152
    %185 = vmatprep.subr.mxu0 0.0
    %186 = vmatpush1.msra.mxu0 %v153
    %187 = vmatprep.subr.mxu0 0.0
    %188 = vmatpush1.msra.mxu0 %v154
    %189 = vmatprep.subr.mxu0 0.0
    %190 = vmatpush1.msra.mxu0 %v155
    %191 = vmatprep.subr.mxu0 0.0
    %192 = vmatpush1.msra.mxu0 %v156
    %193 = vmatprep.subr.mxu0 0.0
    %194 = vmatpush1.msra.mxu0 %v157
    %195 = vmatprep.subr.mxu0 0.0
    %196 = vmatpush1.msra.mxu0 %v158
    %197 = vmatprep.subr.mxu0 0.0
    %198 = vmatpush1.msra.mxu0 %v159
    %199 = vmatprep.subr.mxu0 0.0
    %200 = vmatpush1.msra.mxu0 0.0
    %201 = vmatprep.subr.mxu0 0.0
    %202 = vmatpush1.msra.mxu0 0.0
    %203 = vmatprep.subr.mxu0 0.0
    %204 = vmatpush1.msra.mxu0 0.0
    %205 = vmatprep.subr.mxu0 0.0
    %206 = vmatpush1.msra.mxu0 0.0
    %207 = vmatprep.subr.mxu0 0.0
    %208 = vmatpush1.msra.mxu0 0.0
    %209 = vmatprep.subr.mxu0 0.0
    %210 = vmatpush1.msra.mxu0 0.0
    %211 = vmatprep.subr.mxu0 0.0
    %212 = vmatpush1.msra.mxu0 0.0
    %213 = vmatprep.subr.mxu0 0.0
    %214 = vmatpush1.msra.mxu0 0.0
    %215 = vmatprep.subr.mxu0 0.0
    %216 = vmatpush1.msra.mxu0 0.0
    %217 = vmatprep.subr.mxu0 0.0
    %218 = vmatpush1.msra.mxu0 0.0
    %219 = vmatprep.subr.mxu0 0.0
    %220 = vmatpush1.msra.mxu0 0.0
    %221 = vmatprep.subr.mxu0 0.0
    %222 = vmatpush1.msra.mxu0 0.0
    %223 = vmatprep.subr.mxu0 0.0
    %224 = vmatpush1.msra.mxu0 0.0
    %225 = vmatprep.subr.mxu0 0.0
    %226 = vmatpush1.msra.mxu0 0.0
    %227 = vmatprep.subr.mxu0 0.0
    %228 = vmatpush1.msra.mxu0 0.0
    %229 = vmatprep.subr.mxu0 0.0
    %230 = vmatpush1.msra.mxu0 0.0
    %231 = vmatprep.mubr.f32.mxu0 0.0
    %232 = vmatmul.mubr.f32.gmra.mrb[0].mxu0 %v143
    %v233 = vpop.f32.mrb[0].mxu0
    %v234 = vadd.f32 %v165, %v233
    %v235 = vpop.f32.mrb[0].mxu0
    %236 = vdwg.mxu0
    %237 = vst [vmem:[#allocation7] sm:$0xff] %v234
    // Predicated region
    $region30: #{_fwd2d.1} parent=1 // pred_check
      _
    $region31: #{_fwd2d.1} parent=1 // pred_check_branch
      %239 = sbr.rel (0) target = $region33
    $region32: #{_fwd2d.1} parent=1 // pred_region
      %s241 = ssub.s32 128, 128
      %242 = vsyncadd [#allocation4], %s241
      %s244 = sshll.u32 [#allocation7], 4
      %s245 = int_to_ptr.vmem [resolvable:$true] %s244
      %247 = dma.vmem_to_hbm [thread:$0]  %s245, 128, %s5, [#allocation4]
    $region33: #{_fwd2d.1} parent=1 // pred_fallthru
      _
    // Predicated region
    $region34: #{_fwd2d.1} parent=1 // pred_check
      _
    $region35: #{_fwd2d.1} parent=1 // pred_check_branch
      %249 = sbr.rel (0) target = $region37
    $region36: #{_fwd2d.1} parent=1 // pred_region
      %250 = dma.done [#allocation4], 128
    $region37: #{_fwd2d.1} parent=1 // pred_fallthru
      _
    %251 = vsyncpa [#allocation3], 1
    %252 = vsyncpa [#allocation6], 1
    %253 = vsyncpa [#allocation4], 1

</llo_original>
